<compile_context>
chip_gen: v5e
topology: v5e:2x2
jax: 0.10.0
libtpu: 0.0.40
codegen_flags: <defaults>
</compile_context>

<pallas_src>
import jax
import jax.numpy as jnp
from jax.experimental import pallas as pl
from jax.experimental.pallas import tpu as pltpu


def _cdiv(a, b):
    return -(-a // b)


def _round_up(a, m):
    return ((a + m - 1) // m) * m


def _device_budget():
    """Best-effort (vmem_capacity_bytes, multi_tensorcore) with safe fallbacks."""
    vmem_cap = 64 * 1024 * 1024            # conservative: v7x has the smallest VMEM/TC
    try:
        vmem_cap = int(pltpu.get_tpu_info().vmem_capacity_bytes)
    except Exception:
        pass
    vmem_cap = max(32 << 20, min(vmem_cap, 256 << 20))
    multi_tc = False
    try:
        kind = jax.devices()[0].device_kind.lower()
        multi_tc = ("v7" in kind) or ("7x" in kind)
    except Exception:
        pass
    return vmem_cap, multi_tc


# ----------------------------------------------------------------------------
# Kernels
# ----------------------------------------------------------------------------

def _fused_gate_kernel(seg_ref, tsl_ref, w1t_ref, b1_ref, w2_ref, b2_ref, out_ref):
    """Full-HW path: pool + tiny MLP + gated add, one block = (Bt, C, HW).

    seg/tsl/out: (Bt, C, HW)
    w1t: (C, Cr)  (torch W1 transposed)    b1: (1, 1, Cr)
    w2 : (C, Cr)  (torch-native)           b2: (1, C, 1)
    """
    # Global average pool over spatial (lane reduce); C stays on sublanes.
    pooled = jnp.mean(tsl_ref[...], axis=-1, keepdims=True)                  # (Bt, C, 1)

    # Tiny 32 -> 4 -> 32 MLP on VPU/XLU (keep it off the MXU).
    # h[b, r] = relu(sum_c pooled[b, c] * W1[r, c] + b1[r])  -> sublane reduce
    h = jnp.sum(pooled * w1t_ref[...][None, :, :], axis=1, keepdims=True)    # (Bt, 1, Cr)
    h = jnp.maximum(h + b1_ref[...], 0.0)
    # g[b, c] = sum_r h[b, r] * W2[c, r] + b2[c]             -> lane reduce
    g = jnp.sum(h * w2_ref[...][None, :, :], axis=-1, keepdims=True)         # (Bt, C, 1)
    gate = jax.nn.sigmoid(g + b2_ref[...])                                   # (Bt, C, 1)

    # out = F_seg + F_tsl * gate  (gate broadcasts along lanes / HW for free).
    out_ref[...] = seg_ref[...] + tsl_ref[...] * gate


def _apply_gate_kernel(seg_ref, tsl_ref, gate_ref, out_ref):
    """HW-tiled path: pure streaming elementwise pass; gate precomputed."""
    out_ref[...] = seg_ref[...] + tsl_ref[...] * gate_ref[...]


# ----------------------------------------------------------------------------
# Wrapper
# ----------------------------------------------------------------------------

def cross_task_module(F_seg, F_tsl, w1, b1, w2, b2):
    """F_seg, F_tsl: NCHW float32 (C == 32). w1: (Cr, C), w2: (C, Cr) torch-native.

    Returns F_seg + F_tsl * SE_gate(F_tsl). The Pallas output aliases the F_seg
    buffer; donate F_seg at the jit boundary to make the alias copy-free.
    """
    B, C, H, W = F_tsl.shape
    assert F_seg.shape == F_tsl.shape
    HW = H * W
    Cr = w1.shape[0]

    vmem_cap, multi_tc = _device_budget()
    usable = int(vmem_cap * 0.75)
    # 3 streamed arrays (seg, tsl, out) x double buffering.
    per_array_budget = usable // 6
    target_block = min(4 << 20, per_array_budget)     # 2-4 MiB sweet spot per array

    # NCHW -> (B, C, HW): contiguous reshape, no transpose pass.
    seg = F_seg.reshape(B, C, HW)
    tsl = F_tsl.reshape(B, C, HW)
    row_bytes = C * HW * 4                            # one batch row of one array

    # TODO(synk): for small HW that is not a multiple of 128 (e.g. 7x7/14x14),
    # consider lane-padding the spatial axis to avoid masked vst on writeback.

    use_fused = (row_bytes <= target_block) and not (multi_tc and B < 2)

    if use_fused:
        # ---------------- full-HW fused path ----------------
        max_bt = max(1, target_block // row_bytes)
        if multi_tc and B >= 2:
            # keep >= 2 grid steps so the parallel batch axis feeds both TCs.
            max_bt = min(max_bt, _cdiv(B, 2))
        bt = min(B, max_bt)
        grid_b = _cdiv(B, bt)                         # partial last block OK (elementwise per row)

        pipelined = 3 * 2 * bt * row_bytes
        vmem_limit = min(int(vmem_cap * 0.9), max(32 << 20, pipelined + (8 << 20)))

        w1t = w1.T                                    # (C, Cr), tiny transpose
        b1_3d = b1.reshape(1, 1, Cr)
        b2_3d = b2.reshape(1, C, 1)

        out = pl.pallas_call(
            _fused_gate_kernel,
            out_shape=jax.ShapeDtypeStruct((B, C, HW), jnp.float32),
            grid_spec=pltpu.PrefetchScalarGridSpec(
                num_scalar_prefetch=0,
                grid=(grid_b,),
                in_specs=[
                    pl.BlockSpec((bt, C, HW), lambda b: (b, 0, 0)),   # F_seg
                    pl.BlockSpec((bt, C, HW), lambda b: (b, 0, 0)),   # F_tsl
                    pl.BlockSpec((C, Cr), lambda b: (0, 0)),          # W1^T
                    pl.BlockSpec((1, 1, Cr), lambda b: (0, 0, 0)),    # b1
                    pl.BlockSpec((C, Cr), lambda b: (0, 0)),          # W2 (torch-native)
                    pl.BlockSpec((1, C, 1), lambda b: (0, 0, 0)),     # b2
                ],
                out_specs=pl.BlockSpec((bt, C, HW), lambda b: (b, 0, 0)),
            ),
            input_output_aliases={0: 0},              # write result into the F_seg buffer
            compiler_params=pltpu.CompilerParams(
                dimension_semantics=("parallel",),
                vmem_limit_bytes=vmem_limit),
        )(seg, tsl, w1t, b1_3d, w2, b2_3d)
        return out.reshape(B, C, H, W)

    # ---------------- HW-tiled fallback path ----------------
    # Gate in a cheap pure-JAX preamble (one extra read pass of F_tsl, tiny MLP),
    # then a 2-D "parallel" elementwise streaming pass over (B, HW-tiles).
    pooled = jnp.mean(tsl, axis=-1)                   # (B, C)
    h = jnp.maximum(pooled @ w1.T + b1, 0.0)          # (B, Cr)
    gate = jax.nn.sigmoid(h @ w2.T + b2)              # (B, C)
    gate = gate.reshape(B, C, 1)

    lane = 128
    hw_tile = max(lane, (target_block // (C * 4)) // lane * lane)
    hw_tile = min(hw_tile, _round_up(HW, lane))
    if multi_tc:
        # ensure >= 2 HW tiles so both TensorCores get work (e.g. B == 1).
        hw_tile = min(hw_tile, max(lane, _round_up(_cdiv(HW, 2), lane)))
    grid_hw = _cdiv(HW, hw_tile)                      # partial last tile OK (elementwise)

    pipelined = 3 * 2 * C * hw_tile * 4
    vmem_limit = min(int(vmem_cap * 0.9), max(32 << 20, pipelined + (8 << 20)))

    out = pl.pallas_call(
        _apply_gate_kernel,
        out_shape=jax.ShapeDtypeStruct((B, C, HW), jnp.float32),
        grid_spec=pltpu.PrefetchScalarGridSpec(
            num_scalar_prefetch=0,
            grid=(B, grid_hw),
            in_specs=[
                pl.BlockSpec((1, C, hw_tile), lambda b, s: (b, 0, s)),   # F_seg
                pl.BlockSpec((1, C, hw_tile), lambda b, s: (b, 0, s)),   # F_tsl
                pl.BlockSpec((1, C, 1), lambda b, s: (b, 0, 0)),         # gate
            ],
            out_specs=pl.BlockSpec((1, C, hw_tile), lambda b, s: (b, 0, s)),
        ),
        input_output_aliases={0: 0},
        compiler_params=pltpu.CompilerParams(
            dimension_semantics=("parallel", "parallel"),
            vmem_limit_bytes=vmem_limit),
    )(seg, tsl, gate)
    return out.reshape(B, C, H, W)


def _reference(F_seg, F_tsl, w1, b1, w2, b2):
    # Pure-JAX reference mirroring the PyTorch forward (torch-native weights).
    y = jnp.mean(F_tsl, axis=(2, 3))                  # (B, C) global avg pool
    y = jnp.maximum(y @ w1.T + b1, 0.0)               # linear1 + ReLU
    y = jax.nn.sigmoid(y @ w2.T + b2)                 # linear2 + Sigmoid
    return F_seg + F_tsl * y[:, :, None, None]


if __name__ == "__main__":
    key = jax.random.PRNGKey(0)
    k_seg, k_tsl, k_w1, k_b1, k_w2, k_b2 = jax.random.split(key, 6)

    B, C, H, W = 2, 32, 16, 16      # channel dim fixed at 32 by the module
    reduction = 8
    Cr = C // reduction             # 4

    F_seg = jax.random.normal(k_seg, (B, C, H, W), dtype=jnp.float32)
    F_tsl = jax.random.normal(k_tsl, (B, C, H, W), dtype=jnp.float32)

    # Deterministic parameters, stored torch-native: w1 (out=4, in=32), w2 (out=32, in=4).
    lim1 = 1.0 / jnp.sqrt(C)
    lim2 = 1.0 / jnp.sqrt(Cr)
    w1 = jax.random.uniform(k_w1, (Cr, C), minval=-lim1, maxval=lim1, dtype=jnp.float32)
    b1 = jax.random.uniform(k_b1, (Cr,), minval=-lim1, maxval=lim1, dtype=jnp.float32)
    w2 = jax.random.uniform(k_w2, (C, Cr), minval=-lim2, maxval=lim2, dtype=jnp.float32)
    b2 = jax.random.uniform(k_b2, (C,), minval=-lim2, maxval=lim2, dtype=jnp.float32)

    # Compute the reference BEFORE calling the kernel: F_seg is donated below.
    ref = _reference(F_seg, F_tsl, w1, b1, w2, b2)

    # Donate F_seg so the in-kernel output alias is copy-free (3 HBM passes).
    fn = jax.jit(cross_task_module, donate_argnums=(0,))
    out = jax.block_until_ready(fn(F_seg, F_tsl, w1, b1, w2, b2))

    assert out.shape == (B, C, H, W)
    assert jnp.allclose(out, ref, atol=1e-5, rtol=1e-5), "mismatch vs reference"

    print("KERNEL_OK")
</pallas_src>

<mosaic_0001>
module attributes {stable_mosaic.version = 11 : i64} {
  func.func @_fused_gate_kernel(%arg0: i32, %arg1: memref<2x32x256xf32, #tpu.memory_space<vmem>>, %arg2: memref<2x32x256xf32, #tpu.memory_space<vmem>>, %arg3: memref<32x4xf32, #tpu.memory_space<vmem>>, %arg4: memref<1x1x4xf32, #tpu.memory_space<vmem>>, %arg5: memref<32x4xf32, #tpu.memory_space<vmem>>, %arg6: memref<1x32x1xf32, #tpu.memory_space<vmem>>, %arg7: memref<2x32x256xf32, #tpu.memory_space<vmem>>) attributes {dimension_semantics = [#tpu.dimension_semantics<parallel>], iteration_bounds = array<i64: 1>, scalar_prefetch = 0 : i64, scratch_operands = 0 : i64, tpu.core_type = #tpu.core_type<tc>, window_params = [{transform_indices = @transform_0, window_bounds = array<i64: 2, 32, 256>}, {transform_indices = @transform_1, window_bounds = array<i64: 2, 32, 256>}, {pipeline_mode = #tpu.pipeline_mode<synchronous>, transform_indices = @transform_2, window_bounds = array<i64: 32, 4>}, {pipeline_mode = #tpu.pipeline_mode<synchronous>, transform_indices = @transform_3, window_bounds = array<i64: 1, 1, 4>}, {pipeline_mode = #tpu.pipeline_mode<synchronous>, transform_indices = @transform_4, window_bounds = array<i64: 32, 4>}, {pipeline_mode = #tpu.pipeline_mode<synchronous>, transform_indices = @transform_5, window_bounds = array<i64: 1, 32, 1>}, {transform_indices = @transform_6, window_bounds = array<i64: 2, 32, 256>}]} {
    %c0 = arith.constant 0 : index
    %c0_0 = arith.constant 0 : index
    %c0_1 = arith.constant 0 : index
    %0 = vector.load %arg2[%c0, %c0_0, %c0_1] : memref<2x32x256xf32, #tpu.memory_space<vmem>>, vector<2x32x256xf32>
    %cst = arith.constant dense<0.000000e+00> : vector<2x32xf32>
    %1 = vector.multi_reduction <add>, %0, %cst [2] : vector<2x32x256xf32> to vector<2x32xf32>
    %2 = vector.shape_cast %1 : vector<2x32xf32> to vector<2x32x1xf32>
    %cst_2 = arith.constant 2.560000e+02 : f32
    %3 = vector.broadcast %cst_2 : f32 to vector<2x32x1xf32>
    %4 = arith.divf %2, %3 : vector<2x32x1xf32>
    %c0_3 = arith.constant 0 : index
    %c0_4 = arith.constant 0 : index
    %5 = vector.load %arg3[%c0_3, %c0_4] : memref<32x4xf32, #tpu.memory_space<vmem>>, vector<32x4xf32>
    %6 = vector.shape_cast %5 : vector<32x4xf32> to vector<1x32x4xf32>
    %7 = vector.broadcast %4 : vector<2x32x1xf32> to vector<2x32x4xf32>
    %8 = vector.broadcast %6 : vector<1x32x4xf32> to vector<2x32x4xf32>
    %9 = arith.mulf %7, %8 : vector<2x32x4xf32>
    %cst_5 = arith.constant dense<0.000000e+00> : vector<2x4xf32>
    %10 = vector.multi_reduction <add>, %9, %cst_5 [1] : vector<2x32x4xf32> to vector<2x4xf32>
    %11 = vector.shape_cast %10 : vector<2x4xf32> to vector<2x1x4xf32>
    %c0_6 = arith.constant 0 : index
    %c0_7 = arith.constant 0 : index
    %c0_8 = arith.constant 0 : index
    %12 = vector.load %arg4[%c0_6, %c0_7, %c0_8] : memref<1x1x4xf32, #tpu.memory_space<vmem>>, vector<1x1x4xf32>
    %13 = vector.broadcast %12 : vector<1x1x4xf32> to vector<2x1x4xf32>
    %14 = arith.addf %11, %13 : vector<2x1x4xf32>
    %cst_9 = arith.constant 0.000000e+00 : f32
    %15 = vector.broadcast %cst_9 : f32 to vector<2x1x4xf32>
    %16 = arith.maximumf %14, %15 : vector<2x1x4xf32>
    %c0_10 = arith.constant 0 : index
    %c0_11 = arith.constant 0 : index
    %17 = vector.load %arg5[%c0_10, %c0_11] : memref<32x4xf32, #tpu.memory_space<vmem>>, vector<32x4xf32>
    %18 = vector.shape_cast %17 : vector<32x4xf32> to vector<1x32x4xf32>
    %19 = vector.broadcast %16 : vector<2x1x4xf32> to vector<2x32x4xf32>
    %20 = vector.broadcast %18 : vector<1x32x4xf32> to vector<2x32x4xf32>
    %21 = arith.mulf %19, %20 : vector<2x32x4xf32>
    %cst_12 = arith.constant dense<0.000000e+00> : vector<2x32xf32>
    %22 = vector.multi_reduction <add>, %21, %cst_12 [2] : vector<2x32x4xf32> to vector<2x32xf32>
    %23 = vector.shape_cast %22 : vector<2x32xf32> to vector<2x32x1xf32>
    %c0_13 = arith.constant 0 : index
    %c0_14 = arith.constant 0 : index
    %c0_15 = arith.constant 0 : index
    %24 = vector.load %arg6[%c0_13, %c0_14, %c0_15] : memref<1x32x1xf32, #tpu.memory_space<vmem>>, vector<1x32x1xf32>
    %25 = vector.broadcast %24 : vector<1x32x1xf32> to vector<2x32x1xf32>
    %26 = arith.addf %23, %25 : vector<2x32x1xf32>
    %27 = arith.negf %26 : vector<2x32x1xf32>
    %28 = math.exp %27 : vector<2x32x1xf32>
    %cst_16 = arith.constant 1.000000e+00 : f32
    %29 = vector.broadcast %cst_16 : f32 to vector<2x32x1xf32>
    %30 = arith.addf %29, %28 : vector<2x32x1xf32>
    %31 = arith.divf %29, %30 : vector<2x32x1xf32>
    %c0_17 = arith.constant 0 : index
    %c0_18 = arith.constant 0 : index
    %c0_19 = arith.constant 0 : index
    %32 = vector.load %arg1[%c0_17, %c0_18, %c0_19] : memref<2x32x256xf32, #tpu.memory_space<vmem>>, vector<2x32x256xf32>
    %c0_20 = arith.constant 0 : index
    %c0_21 = arith.constant 0 : index
    %c0_22 = arith.constant 0 : index
    %33 = vector.load %arg2[%c0_20, %c0_21, %c0_22] : memref<2x32x256xf32, #tpu.memory_space<vmem>>, vector<2x32x256xf32>
    %34 = vector.broadcast %31 : vector<2x32x1xf32> to vector<2x32x256xf32>
    %35 = arith.mulf %33, %34 : vector<2x32x256xf32>
    %36 = arith.addf %32, %35 : vector<2x32x256xf32>
    %c0_23 = arith.constant 0 : index
    %c0_24 = arith.constant 0 : index
    %c0_25 = arith.constant 0 : index
    %37 = vector.load %arg7[%c0_23, %c0_24, %c0_25] : memref<2x32x256xf32, #tpu.memory_space<vmem>>, vector<2x32x256xf32>
    tpu.vector_store %arg7[%c0_23, %c0_24, %c0_25], %36 {strides = array<i32>} : memref<2x32x256xf32, #tpu.memory_space<vmem>>, vector<2x32x256xf32>,
    return
  }
  func.func @transform_0(%arg0: i32) -> (i32, i32, i32) {
    %c0_i32 = arith.constant 0 : i32
    %c0_i32_0 = arith.constant 0 : i32
    %c0_i32_1 = arith.constant 0 : i32
    return %arg0, %c0_i32, %c0_i32_0 : i32, i32, i32
  }
  func.func @transform_1(%arg0: i32) -> (i32, i32, i32) {
    %c0_i32 = arith.constant 0 : i32
    %c0_i32_0 = arith.constant 0 : i32
    %c0_i32_1 = arith.constant 0 : i32
    return %arg0, %c0_i32, %c0_i32_0 : i32, i32, i32
  }
  func.func @transform_2(%arg0: i32) -> (i32, i32) {
    %c0_i32 = arith.constant 0 : i32
    %c0_i32_0 = arith.constant 0 : i32
    %c0_i32_1 = arith.constant 0 : i32
    return %c0_i32, %c0_i32_0 : i32, i32
  }
  func.func @transform_3(%arg0: i32) -> (i32, i32, i32) {
    %c0_i32 = arith.constant 0 : i32
    %c0_i32_0 = arith.constant 0 : i32
    %c0_i32_1 = arith.constant 0 : i32
    %c0_i32_2 = arith.constant 0 : i32
    return %c0_i32, %c0_i32_0, %c0_i32_1 : i32, i32, i32
  }
  func.func @transform_4(%arg0: i32) -> (i32, i32) {
    %c0_i32 = arith.constant 0 : i32
    %c0_i32_0 = arith.constant 0 : i32
    %c0_i32_1 = arith.constant 0 : i32
    return %c0_i32, %c0_i32_0 : i32, i32
  }
  func.func @transform_5(%arg0: i32) -> (i32, i32, i32) {
    %c0_i32 = arith.constant 0 : i32
    %c0_i32_0 = arith.constant 0 : i32
    %c0_i32_1 = arith.constant 0 : i32
    %c0_i32_2 = arith.constant 0 : i32
    return %c0_i32, %c0_i32_0, %c0_i32_1 : i32, i32, i32
  }
  func.func @transform_6(%arg0: i32) -> (i32, i32, i32) {
    %c0_i32 = arith.constant 0 : i32
    %c0_i32_0 = arith.constant 0 : i32
    %c0_i32_1 = arith.constant 0 : i32
    return %arg0, %c0_i32, %c0_i32_0 : i32, i32, i32
  }
}

</mosaic_0001>

<llo_original>
// kernel: cross_task_module.1
$region0: #{cross_task_module.1}
  #allocation0 [shape = 'u32[]', space=smem, size = 0x4, offset = 0x4, fixed_abs, tag = 'smem constant byte address 0x4 - core index']
  #allocation1 [shape = 'u32[72,128]{1,0:T(1,128)}', space=vmem, size = 0x9000, scoped, tag = 'internal scratch']
  %s0 = inlined_call_operand.vmem [shape: f32[2,32,256], index: 0, kind: input, shape index: {}, may-alias: {0,6}]
  %s1 = inlined_call_operand.vmem [shape: f32[2,32,256], index: 1, kind: input, shape index: {}]
  %s2 = inlined_call_operand.vmem [shape: f32[32,4], index: 2, kind: input, shape index: {}]
  %s3 = inlined_call_operand.vmem [shape: f32[1,1,4], index: 3, kind: input, shape index: {}]
  %s4 = inlined_call_operand.vmem [shape: f32[32,4], index: 4, kind: input, shape index: {}]
  %s5 = inlined_call_operand.vmem [shape: f32[1,32,1], index: 5, kind: input, shape index: {}]
  %s6 = inlined_call_operand.vmem [shape: f32[2,32,256], index: 6, kind: output, shape index: {}, may-alias: {0,6}]
  %s7 = sld [smem:[#allocation0]]
  $region34: #{cross_task_module.1} parent=0
    _
  %s9 = ssub.s32 1, %s7
  %s10 = scalar_select 0, %s9, %s7
  // Predicated region
  $region2: #{cross_task_module.1} parent=0 // pred_check
    _
  $region3: #{cross_task_module.1} parent=0 // pred_check_branch
    %12 = sbr.rel (0) target = $region5
  $region4: #{cross_task_module.1} parent=0 // pred_region
    _
  $region5: #{cross_task_module.1} parent=0 // pred_fallthru
    _
  // Predicated region
  $region6: #{cross_task_module.1} parent=0 // pred_check
    _
  $region7: #{cross_task_module.1} parent=0 // pred_check_branch
    %14 = sbr.rel (0) target = $region9
  $region8: #{cross_task_module.1} parent=0 // pred_region
    _
  $region9: #{cross_task_module.1} parent=0 // pred_fallthru
    _
  // Predicated region
  $region10: #{cross_task_module.1} parent=0 // pred_check
    _
  $region11: #{cross_task_module.1} parent=0 // pred_check_branch
    %16 = sbr.rel (0) target = $region13
  $region12: #{cross_task_module.1} parent=0 // pred_region
    _
  $region13: #{cross_task_module.1} parent=0 // pred_fallthru
    _
  // Predicated region
  $region14: #{cross_task_module.1} parent=0 // pred_check
    _
  $region15: #{cross_task_module.1} parent=0 // pred_check_branch
    %18 = sbr.rel (0) target = $region17
  $region16: #{cross_task_module.1} parent=0 // pred_region
    _
  $region17: #{cross_task_module.1} parent=0 // pred_fallthru
    _
  // Predicated region
  $region18: #{cross_task_module.1} parent=0 // pred_check
    _
  $region19: #{cross_task_module.1} parent=0 // pred_check_branch
    %20 = sbr.rel (0) target = $region21
  $region20: #{cross_task_module.1} parent=0 // pred_region
    _
  $region21: #{cross_task_module.1} parent=0 // pred_fallthru
    _
  // Predicated region
  $region22: #{cross_task_module.1} parent=0 // pred_check
    _
  $region23: #{cross_task_module.1} parent=0 // pred_check_branch
    %22 = sbr.rel (0) target = $region25
  $region24: #{cross_task_module.1} parent=0 // pred_region
    _
  $region25: #{cross_task_module.1} parent=0 // pred_fallthru
    _
  %v23 = vld [vmem:[%s1] sm:$0xff]
  %v24 = vld [vmem:[%s1 + $0x8] sm:$0xff]
  %v25 = vld [vmem:[%s1 + $0x10] sm:$0xff]
  %v26 = vld [vmem:[%s1 + $0x18] sm:$0xff]
  %v27 = vld [vmem:[%s1 + $0x20] sm:$0xff]
  %v28 = vld [vmem:[%s1 + $0x28] sm:$0xff]
  %v29 = vld [vmem:[%s1 + $0x30] sm:$0xff]
  %v30 = vld [vmem:[%s1 + $0x38] sm:$0xff]
  %v31 = vld [vmem:[%s1 + $0x40] sm:$0xff]
  %v32 = vld [vmem:[%s1 + $0x48] sm:$0xff]
  %v33 = vld [vmem:[%s1 + $0x50] sm:$0xff]
  %v34 = vld [vmem:[%s1 + $0x58] sm:$0xff]
  %v35 = vld [vmem:[%s1 + $0x60] sm:$0xff]
  %v36 = vld [vmem:[%s1 + $0x68] sm:$0xff]
  %v37 = vld [vmem:[%s1 + $0x70] sm:$0xff]
  %v38 = vld [vmem:[%s1 + $0x78] sm:$0xff]
  %v39 = vadd.f32 %v23, %v24
  %40 = vadd.xlane.f32.xlu0 %v39
  %v41 = vpop.xlane.xlu0 %40
  %v42 = vadd.f32 %v25, %v26
  %43 = vadd.xlane.f32.xlu0 %v42
  %v44 = vpop.xlane.xlu0 %43
  %v45 = vadd.f32 %v27, %v28
  %46 = vadd.xlane.f32.xlu0 %v45
  %v47 = vpop.xlane.xlu0 %46
  %v48 = vadd.f32 %v29, %v30
  %49 = vadd.xlane.f32.xlu0 %v48
  %v50 = vpop.xlane.xlu0 %49
  %v51 = vadd.f32 %v31, %v32
  %52 = vadd.xlane.f32.xlu0 %v51
  %v53 = vpop.xlane.xlu0 %52
  %v54 = vadd.f32 %v33, %v34
  %55 = vadd.xlane.f32.xlu0 %v54
  %v56 = vpop.xlane.xlu0 %55
  %v57 = vadd.f32 %v35, %v36
  %58 = vadd.xlane.f32.xlu0 %v57
  %v59 = vpop.xlane.xlu0 %58
  %v60 = vadd.f32 %v37, %v38
  %61 = vadd.xlane.f32.xlu0 %v60
  %v62 = vpop.xlane.xlu0 %61
  %v63 = vrcp.pop 256.0
  %v64 = vmul.f32 256.0, %v63
  %v65 = vsub.f32 1.0, %v64
  %v66 = vmul.f32 %v63, %v65
  %v67 = vadd.f32 %v63, %v66
  %vm68 = vweird.f32 %v63
  %v69 = vsel %vm68, %v63, %v67
  %v70 = vmul.f32 %v41, %v69
  %v71 = vmul.f32 %v44, %v69
  %v72 = vmul.f32 %v47, %v69
  %v73 = vmul.f32 %v50, %v69
  %v74 = vmul.f32 %v53, %v69
  %v75 = vmul.f32 %v56, %v69
  %v76 = vmul.f32 %v59, %v69
  %v77 = vmul.f32 %v62, %v69
  %v78 = vld [vmem:[%s2] sm:$0xff]
  %v79 = vld [vmem:[%s2 + $0x8] sm:$0xff]
  %v80 = vld [vmem:[%s2 + $0x10] sm:$0xff]
  %v81 = vld [vmem:[%s2 + $0x18] sm:$0xff]
  %v82 = vmul.f32 %v70, %v78
  %v83 = vmul.f32 %v71, %v79
  %v84 = vmul.f32 %v72, %v80
  %v85 = vmul.f32 %v73, %v81
  %v86 = vmul.f32 %v74, %v78
  %v87 = vmul.f32 %v75, %v79
  %v88 = vmul.f32 %v76, %v80
  %v89 = vmul.f32 %v77, %v81
  %vm90 = vcmask 31744
  %v91 = vsel %vm90, %v82, 0.0
  %v92 = vsel %vm90, %v83, 0.0
  %v93 = vadd.f32 %v91, %v92
  %v94 = vsel %vm90, %v84, 0.0
  %v95 = vadd.f32 %v93, %v94
  %v96 = vsel %vm90, %v85, 0.0
  %v97 = vadd.f32 %v95, %v96
  %v98 = vrot.slane %v97, 4
  %v99 = vadd.f32 %v97, %v98
  %v100 = vrot.slane %v99, 2
  %v101 = vadd.f32 %v99, %v100
  %v102 = vrot.slane %v101, 1
  %v103 = vadd.f32 %v101, %v102
  %v104 = vsel %vm90, %v86, 0.0
  %v105 = vsel %vm90, %v87, 0.0
  %v106 = vadd.f32 %v104, %v105
  %v107 = vsel %vm90, %v88, 0.0
  %v108 = vadd.f32 %v106, %v107
  %v109 = vsel %vm90, %v89, 0.0
  %v110 = vadd.f32 %v108, %v109
  %v111 = vrot.slane %v110, 4
  %v112 = vadd.f32 %v110, %v111
  %v113 = vrot.slane %v112, 2
  %v114 = vadd.f32 %v112, %v113
  %v115 = vrot.slane %v114, 1
  %v116 = vadd.f32 %v114, %v115
  %v117 = vld [vmem:[%s3] sm:$0x1]
  %v118 = vadd.f32 %v103, %v117
  %v119 = vadd.f32 %v116, %v117
  %v120 = vmax.f32 %v118, 0.0
  %v121 = vmax.f32 %v119, 0.0
  %v122 = vld [vmem:[%s4] sm:$0xff]
  %v123 = vld [vmem:[%s4 + $0x8] sm:$0xff]
  %v124 = vld [vmem:[%s4 + $0x10] sm:$0xff]
  %v125 = vld [vmem:[%s4 + $0x18] sm:$0xff]
  %v126 = vperm.slane %v120, 0
  %v127 = vperm.slane %v121, 0
  %v128 = vmul.f32 %v126, %v122
  %v129 = vmul.f32 %v126, %v123
  %v130 = vmul.f32 %v126, %v124
  %v131 = vmul.f32 %v126, %v125
  %v132 = vmul.f32 %v127, %v122
  %v133 = vmul.f32 %v127, %v123
  %v134 = vmul.f32 %v127, %v124
  %v135 = vmul.f32 %v127, %v125
  %v136 = vsel %vm90, %v128, 0.0
  %137 = vadd.xlane.f32.xlu0 %v136
  %v138 = vpop.xlane.xlu0 %137
  %v139 = vsel %vm90, %v129, 0.0
  %140 = vadd.xlane.f32.xlu0 %v139
  %v141 = vpop.xlane.xlu0 %140
  %v142 = vsel %vm90, %v130, 0.0
  %143 = vadd.xlane.f32.xlu0 %v142
  %v144 = vpop.xlane.xlu0 %143
  %v145 = vsel %vm90, %v131, 0.0
  %146 = vadd.xlane.f32.xlu0 %v145
  %v147 = vpop.xlane.xlu0 %146
  %v148 = vsel %vm90, %v132, 0.0
  %149 = vadd.xlane.f32.xlu0 %v148
  %v150 = vpop.xlane.xlu0 %149
  %v151 = vsel %vm90, %v133, 0.0
  %152 = vadd.xlane.f32.xlu0 %v151
  %v153 = vpop.xlane.xlu0 %152
  %v154 = vsel %vm90, %v134, 0.0
  %155 = vadd.xlane.f32.xlu0 %v154
  %v156 = vpop.xlane.xlu0 %155
  %v157 = vsel %vm90, %v135, 0.0
  %158 = vadd.xlane.f32.xlu0 %v157
  %v159 = vpop.xlane.xlu0 %158
  %v160 = vld [vmem:[%s5] sm:$0xff]
  %v161 = vld [vmem:[%s5 + $0x8] sm:$0xff]
  %v162 = vld [vmem:[%s5 + $0x10] sm:$0xff]
  %v163 = vld [vmem:[%s5 + $0x18] sm:$0xff]
  %v164 = vadd.f32 %v138, %v160
  %v165 = vadd.f32 %v141, %v161
  %v166 = vadd.f32 %v144, %v162
  %v167 = vadd.f32 %v147, %v163
  %v168 = vadd.f32 %v150, %v160
  %v169 = vadd.f32 %v153, %v161
  %v170 = vadd.f32 %v156, %v162
  %v171 = vadd.f32 %v159, %v163
  %v172 = vxor.u32 %v164, 2147483648
  %v173 = vxor.u32 %v165, 2147483648
  %v174 = vxor.u32 %v166, 2147483648
  %v175 = vxor.u32 %v167, 2147483648
  %v176 = vxor.u32 %v168, 2147483648
  %v177 = vxor.u32 %v169, 2147483648
  %v178 = vxor.u32 %v170, 2147483648
  %v179 = vxor.u32 %v171, 2147483648
  %v180 = vmul.f32 %v172, 1.442695
  %v181 = vpow.pop %v180
  %v182 = vmul.f32 %v173, 1.442695
  %v183 = vpow.pop %v182
  %v184 = vmul.f32 %v174, 1.442695
  %v185 = vpow.pop %v184
  %v186 = vmul.f32 %v175, 1.442695
  %v187 = vpow.pop %v186
  %v188 = vmul.f32 %v176, 1.442695
  %v189 = vpow.pop %v188
  %v190 = vmul.f32 %v177, 1.442695
  %v191 = vpow.pop %v190
  %v192 = vmul.f32 %v178, 1.442695
  %v193 = vpow.pop %v192
  %v194 = vmul.f32 %v179, 1.442695
  %v195 = vpow.pop %v194
  %v196 = vadd.f32 %v181, 1.0
  %v197 = vadd.f32 %v183, 1.0
  %v198 = vadd.f32 %v185, 1.0
  %v199 = vadd.f32 %v187, 1.0
  %v200 = vadd.f32 %v189, 1.0
  %v201 = vadd.f32 %v191, 1.0
  %v202 = vadd.f32 %v193, 1.0
  %v203 = vadd.f32 %v195, 1.0
  %v204 = vrcp.pop %v196
  %v205 = vmul.f32 %v196, %v204
  %v206 = vsub.f32 1.0, %v205
  %v207 = vmul.f32 %v204, %v206
  %v208 = vadd.f32 %v204, %v207
  %vm209 = vweird.f32 %v196
  %vm210 = vweird.f32 %v204
  %vm211 = vmor %vm209, %vm210
  %v212 = vsel %vm211, %v204, %v208
  %v213 = vand.u32 2147483647, %v196
  %vm214 = vcmp.eq.f32.partialorder %v213, 8.507059e+37
  %v215 = vand.u32 %v196, 2147483648
  %v216 = vor.u32 1.1754944e-38, %v215
  %v217 = vsel %vm214, %v216, %v212
  %v218 = vmul.f32 1.0, %v217
  %v219 = vrcp.pop %v197
  %v220 = vmul.f32 %v197, %v219
  %v221 = vsub.f32 1.0, %v220
  %v222 = vmul.f32 %v219, %v221
  %v223 = vadd.f32 %v219, %v222
  %vm224 = vweird.f32 %v197
  %vm225 = vweird.f32 %v219
  %vm226 = vmor %vm224, %vm225
  %v227 = vsel %vm226, %v219, %v223
  %v228 = vand.u32 2147483647, %v197
  %vm229 = vcmp.eq.f32.partialorder %v228, 8.507059e+37
  %v230 = vand.u32 %v197, 2147483648
  %v231 = vor.u32 1.1754944e-38, %v230
  %v232 = vsel %vm229, %v231, %v227
  %v233 = vmul.f32 1.0, %v232
  %v234 = vrcp.pop %v198
  %v235 = vmul.f32 %v198, %v234
  %v236 = vsub.f32 1.0, %v235
  %v237 = vmul.f32 %v234, %v236
  %v238 = vadd.f32 %v234, %v237
  %vm239 = vweird.f32 %v198
  %vm240 = vweird.f32 %v234
  %vm241 = vmor %vm239, %vm240
  %v242 = vsel %vm241, %v234, %v238
  %v243 = vand.u32 2147483647, %v198
  %vm244 = vcmp.eq.f32.partialorder %v243, 8.507059e+37
  %v245 = vand.u32 %v198, 2147483648
  %v246 = vor.u32 1.1754944e-38, %v245
  %v247 = vsel %vm244, %v246, %v242
  %v248 = vmul.f32 1.0, %v247
  %v249 = vrcp.pop %v199
  %v250 = vmul.f32 %v199, %v249
  %v251 = vsub.f32 1.0, %v250
  %v252 = vmul.f32 %v249, %v251
  %v253 = vadd.f32 %v249, %v252
  %vm254 = vweird.f32 %v199
  %vm255 = vweird.f32 %v249
  %vm256 = vmor %vm254, %vm255
  %v257 = vsel %vm256, %v249, %v253
  %v258 = vand.u32 2147483647, %v199
  %vm259 = vcmp.eq.f32.partialorder %v258, 8.507059e+37
  %v260 = vand.u32 %v199, 2147483648
  %v261 = vor.u32 1.1754944e-38, %v260
  %v262 = vsel %vm259, %v261, %v257
  %v263 = vmul.f32 1.0, %v262
  %v264 = vrcp.pop %v200
  %v265 = vmul.f32 %v200, %v264
  %v266 = vsub.f32 1.0, %v265
  %v267 = vmul.f32 %v264, %v266
  %v268 = vadd.f32 %v264, %v267
  %vm269 = vweird.f32 %v200
  %vm270 = vweird.f32 %v264
  %vm271 = vmor %vm269, %vm270
  %v272 = vsel %vm271, %v264, %v268
  %v273 = vand.u32 2147483647, %v200
  %vm274 = vcmp.eq.f32.partialorder %v273, 8.507059e+37
  %v275 = vand.u32 %v200, 2147483648
  %v276 = vor.u32 1.1754944e-38, %v275
  %v277 = vsel %vm274, %v276, %v272
  %v278 = vmul.f32 1.0, %v277
  %v279 = vrcp.pop %v201
  %v280 = vmul.f32 %v201, %v279
  %v281 = vsub.f32 1.0, %v280
  %v282 = vmul.f32 %v279, %v281
  %v283 = vadd.f32 %v279, %v282
  %vm284 = vweird.f32 %v201
  %vm285 = vweird.f32 %v279
  %vm286 = vmor %vm284, %vm285
  %v287 = vsel %vm286, %v279, %v283
  %v288 = vand.u32 2147483647, %v201
  %vm289 = vcmp.eq.f32.partialorder %v288, 8.507059e+37
  %v290 = vand.u32 %v201, 2147483648
  %v291 = vor.u32 1.1754944e-38, %v290
  %v292 = vsel %vm289, %v291, %v287
  %v293 = vmul.f32 1.0, %v292
  %v294 = vrcp.pop %v202
  %v295 = vmul.f32 %v202, %v294
  %v296 = vsub.f32 1.0, %v295
  %v297 = vmul.f32 %v294, %v296
  %v298 = vadd.f32 %v294, %v297
  %vm299 = vweird.f32 %v202
  %vm300 = vweird.f32 %v294
  %vm301 = vmor %vm299, %vm300
  %v302 = vsel %vm301, %v294, %v298
  %v303 = vand.u32 2147483647, %v202
  %vm304 = vcmp.eq.f32.partialorder %v303, 8.507059e+37
  %v305 = vand.u32 %v202, 2147483648
  %v306 = vor.u32 1.1754944e-38, %v305
  %v307 = vsel %vm304, %v306, %v302
  %v308 = vmul.f32 1.0, %v307
  %v309 = vrcp.pop %v203
  %v310 = vmul.f32 %v203, %v309
  %v311 = vsub.f32 1.0, %v310
  %v312 = vmul.f32 %v309, %v311
  %v313 = vadd.f32 %v309, %v312
  %vm314 = vweird.f32 %v203
  %vm315 = vweird.f32 %v309
  %vm316 = vmor %vm314, %vm315
  %v317 = vsel %vm316, %v309, %v313
  %v318 = vand.u32 2147483647, %v203
  %vm319 = vcmp.eq.f32.partialorder %v318, 8.507059e+37
  %v320 = vand.u32 %v203, 2147483648
  %v321 = vor.u32 1.1754944e-38, %v320
  %v322 = vsel %vm319, %v321, %v317
  %v323 = vmul.f32 1.0, %v322
  %v324 = vld [vmem:[%s0] sm:$0xff]
  %v325 = vld [vmem:[%s0 + $0x8] sm:$0xff]
  %v326 = vld [vmem:[%s0 + $0x10] sm:$0xff]
  %v327 = vld [vmem:[%s0 + $0x18] sm:$0xff]
  %v328 = vld [vmem:[%s0 + $0x20] sm:$0xff]
  %v329 = vld [vmem:[%s0 + $0x28] sm:$0xff]
  %v330 = vld [vmem:[%s0 + $0x30] sm:$0xff]
  %v331 = vld [vmem:[%s0 + $0x38] sm:$0xff]
  %v332 = vld [vmem:[%s0 + $0x40] sm:$0xff]
  %v333 = vld [vmem:[%s0 + $0x48] sm:$0xff]
  %v334 = vld [vmem:[%s0 + $0x50] sm:$0xff]
  %v335 = vld [vmem:[%s0 + $0x58] sm:$0xff]
  %v336 = vld [vmem:[%s0 + $0x60] sm:$0xff]
  %v337 = vld [vmem:[%s0 + $0x68] sm:$0xff]
  %v338 = vld [vmem:[%s0 + $0x70] sm:$0xff]
  %v339 = vld [vmem:[%s0 + $0x78] sm:$0xff]
  %341 = vset.pattern.permute.xlu0 0
  %342 = vperm.xlu0 %341, %v218
  %v343 = vpop.permute.xlu0 %342
  %346 = vset.pattern.permute.xlu0 0
  %347 = vperm.xlu0 %346, %v233
  %v348 = vpop.permute.xlu0 %347
  %351 = vset.pattern.permute.xlu0 0
  %352 = vperm.xlu0 %351, %v248
  %v353 = vpop.permute.xlu0 %352
  %356 = vset.pattern.permute.xlu0 0
  %357 = vperm.xlu0 %356, %v263
  %v358 = vpop.permute.xlu0 %357
  %361 = vset.pattern.permute.xlu0 0
  %362 = vperm.xlu0 %361, %v278
  %v363 = vpop.permute.xlu0 %362
  %366 = vset.pattern.permute.xlu0 0
  %367 = vperm.xlu0 %366, %v293
  %v368 = vpop.permute.xlu0 %367
  %371 = vset.pattern.permute.xlu0 0
  %372 = vperm.xlu0 %371, %v308
  %v373 = vpop.permute.xlu0 %372
  %376 = vset.pattern.permute.xlu0 0
  %377 = vperm.xlu0 %376, %v323
  %v378 = vpop.permute.xlu0 %377
  %v380 = vmul.f32 %v23, %v343
  %v381 = vmul.f32 %v24, %v343
  %v382 = vmul.f32 %v25, %v348
  %v383 = vmul.f32 %v26, %v348
  %v384 = vmul.f32 %v27, %v353
  %v385 = vmul.f32 %v28, %v353
  %v386 = vmul.f32 %v29, %v358
  %v387 = vmul.f32 %v30, %v358
  %v388 = vmul.f32 %v31, %v363
  %v389 = vmul.f32 %v32, %v363
  %v390 = vmul.f32 %v33, %v368
  %v391 = vmul.f32 %v34, %v368
  %v392 = vmul.f32 %v35, %v373
  %v393 = vmul.f32 %v36, %v373
  %v394 = vmul.f32 %v37, %v378
  %v395 = vmul.f32 %v38, %v378
  %v396 = vadd.f32 %v324, %v380
  %v397 = vadd.f32 %v325, %v381
  %v398 = vadd.f32 %v326, %v382
  %v399 = vadd.f32 %v327, %v383
  %v400 = vadd.f32 %v328, %v384
  %v401 = vadd.f32 %v329, %v385
  %v402 = vadd.f32 %v330, %v386
  %v403 = vadd.f32 %v331, %v387
  %v404 = vadd.f32 %v332, %v388
  %v405 = vadd.f32 %v333, %v389
  %v406 = vadd.f32 %v334, %v390
  %v407 = vadd.f32 %v335, %v391
  %v408 = vadd.f32 %v336, %v392
  %v409 = vadd.f32 %v337, %v393
  %v410 = vadd.f32 %v338, %v394
  %v411 = vadd.f32 %v339, %v395
  %412 = vst [vmem:[%s6] sm:$0xff] %v396
  %413 = vst [vmem:[%s6 + $0x8] sm:$0xff] %v397
  %414 = vst [vmem:[%s6 + $0x10] sm:$0xff] %v398
  %415 = vst [vmem:[%s6 + $0x18] sm:$0xff] %v399
  %416 = vst [vmem:[%s6 + $0x20] sm:$0xff] %v400
  %417 = vst [vmem:[%s6 + $0x28] sm:$0xff] %v401
  %418 = vst [vmem:[%s6 + $0x30] sm:$0xff] %v402
  %419 = vst [vmem:[%s6 + $0x38] sm:$0xff] %v403
  %420 = vst [vmem:[%s6 + $0x40] sm:$0xff] %v404
  %421 = vst [vmem:[%s6 + $0x48] sm:$0xff] %v405
  %422 = vst [vmem:[%s6 + $0x50] sm:$0xff] %v406
  %423 = vst [vmem:[%s6 + $0x58] sm:$0xff] %v407
  %424 = vst [vmem:[%s6 + $0x60] sm:$0xff] %v408
  %425 = vst [vmem:[%s6 + $0x68] sm:$0xff] %v409
  %426 = vst [vmem:[%s6 + $0x70] sm:$0xff] %v410
  %427 = vst [vmem:[%s6 + $0x78] sm:$0xff] %v411
  // Predicated region
  $region26: #{cross_task_module.1} parent=0 // pred_check
    _
  $region27: #{cross_task_module.1} parent=0 // pred_check_branch
    %429 = sbr.rel (0) target = $region29
  $region28: #{cross_task_module.1} parent=0 // pred_region
    _
  $region29: #{cross_task_module.1} parent=0 // pred_fallthru
    _
  // Predicated region
  $region30: #{cross_task_module.1} parent=0 // pred_check
    _
  $region31: #{cross_task_module.1} parent=0 // pred_check_branch
    %431 = sbr.rel (0) target = $region33
  $region32: #{cross_task_module.1} parent=0 // pred_region
    _
  $region33: #{cross_task_module.1} parent=0 // pred_fallthru
    _

</llo_original>
